<compile_context>
chip_gen: v6e
topology: v6e:2x2x1
jax: 0.10.0
libtpu: 0.0.40
codegen_flags: <defaults>
</compile_context>

<pallas_src>
import math

import jax
import jax.numpy as jnp
from jax.experimental import pallas as pl
from jax.experimental.pallas import tpu as pltpu


def _round_up(v: int, m: int) -> int:
    return ((v + m - 1) // m) * m


def _lcm(a: int, b: int) -> int:
    return a * b // math.gcd(a, b)


def _make_encoder_kernel(in_dim: int):
    def encoder_kernel(a_ref, xs_ref, x_ref, norm_ref, w_ref, b_ref, o_ref,
                       acc_ref):
        k = pl.program_id(1)

        # ---- init accumulator on first K step ----
        @pl.when(k == 0)
        def _():
            acc_ref[...] = jnp.zeros_like(acc_ref)

        # ---- streamed propagation: acc += A_tile @ (norm * x)_tile ----
        acc_ref[...] += jnp.dot(a_ref[...], xs_ref[...],
                                preferred_element_type=jnp.float32)

        # ---- epilogue only on the last K step ----
        @pl.when(k == pl.num_programs(1) - 1)
        def _():
            x1 = acc_ref[...] * norm_ref[...]            # outer degree scaling
            w0 = w_ref[0:in_dim, :]                      # [D, Hpad]
            w1 = w_ref[in_dim:2 * in_dim, :]             # [D, Hpad]
            h = (jnp.dot(x_ref[...], w0, preferred_element_type=jnp.float32)
                 + jnp.dot(x1, w1, preferred_element_type=jnp.float32)
                 + b_ref[...])                           # [tm, Hpad]
            # L2 normalize via rsqrt (EUP slot) + multiply instead of divide.
            inv = jax.lax.rsqrt(jnp.sum(h * h, axis=1, keepdims=True))
            o_ref[...] = h * inv

    return encoder_kernel


def encoder_forward(adj, x, w, b, *, tm=256, tk=1024):
    """adj: [N,N], x: [N,in_dim], w: [2*in_dim,hidden], b: [hidden] -> [N,hidden]."""
    n, in_dim = x.shape
    hidden = w.shape[1]

    # ---- hoisted degree normalization (cheap O(N^2) read done once by XLA) ----
    deg = jnp.maximum(jnp.sum(adj.astype(jnp.float32), axis=1, keepdims=True), 1.0)
    norm = jax.lax.rsqrt(deg)                            # [N, 1]
    xs = x.astype(jnp.float32) * norm                    # inner prescale

    # ---- tile sizes (rows multiple of 8, reduction axis multiple of 128) ----
    tm = min(tm, _round_up(n, 8))
    tk = min(tk, _round_up(n, 128))
    n_pad = _round_up(n, _lcm(tm, tk))
    h_pad = _round_up(hidden, 128)                       # lane-dense output

    # ---- zero-pad operands (padded rows/cols contribute nothing; sliced off) ----
    adj_p = jnp.zeros((n_pad, n_pad), jnp.float32).at[:n, :n].set(adj)
    x_p = jnp.zeros((n_pad, in_dim), jnp.float32).at[:n, :].set(x)
    xs_p = jnp.zeros((n_pad, in_dim), jnp.float32).at[:n, :].set(xs)
    norm_p = jnp.zeros((n_pad, 1), jnp.float32).at[:n, :].set(norm)
    w_p = jnp.zeros((2 * in_dim, h_pad), jnp.float32).at[:, :hidden].set(w)
    b_p = jnp.zeros((1, h_pad), jnp.float32).at[0, :hidden].set(b)

    grid = (n_pad // tm, n_pad // tk)

    out = pl.pallas_call(
        _make_encoder_kernel(in_dim),
        out_shape=jax.ShapeDtypeStruct((n_pad, h_pad), jnp.float32),
        grid_spec=pltpu.PrefetchScalarGridSpec(
            num_scalar_prefetch=0,
            grid=grid,
            in_specs=[
                pl.BlockSpec((tm, tk), lambda i, k: (i, k)),            # A tile
                pl.BlockSpec((tk, in_dim), lambda i, k: (k, 0)),        # xs (K tile)
                pl.BlockSpec((tm, in_dim), lambda i, k: (i, 0)),        # raw x (row)
                pl.BlockSpec((tm, 1), lambda i, k: (i, 0)),             # outer norm
                pl.BlockSpec((2 * in_dim, h_pad), lambda i, k: (0, 0)),  # W resident
                pl.BlockSpec((1, h_pad), lambda i, k: (0, 0)),          # bias resident
            ],
            out_specs=pl.BlockSpec((tm, h_pad), lambda i, k: (i, 0)),
            scratch_shapes=[pltpu.VMEM((tm, in_dim), jnp.float32)],
        ),
        compiler_params=pltpu.CompilerParams(
            dimension_semantics=("parallel", "arbitrary"),
            vmem_limit_bytes=48 * 1024 * 1024,   # headroom below 64 MiB (v7x)
        ),
    )(adj_p, xs_p, x_p, norm_p, w_p, b_p)

    return out[:n, :hidden]


def _reference(adj, x, w, b):
    """Pure-JAX reference of TAGConv(k=1) + L2 normalize."""
    deg = jnp.maximum(adj.sum(axis=1, keepdims=True), 1.0)
    norm = deg ** -0.5
    x1 = norm * (adj @ (norm * x))
    h = jnp.concatenate([x, x1], axis=-1) @ w + b
    return h / jnp.sqrt((h * h).sum(axis=1, keepdims=True))


if __name__ == "__main__":
    N, IN_DIM, HIDDEN = 8, 16, 32

    key = jax.random.PRNGKey(0)
    k_x, k_w, k_b, k_a = jax.random.split(key, 4)

    # deterministic node features
    x = jax.random.normal(k_x, (N, IN_DIM), dtype=jnp.float32)

    # deterministic symmetric adjacency (undirected graph, no self loops)
    a_rand = jax.random.uniform(k_a, (N, N))
    a_upper = (a_rand > 0.5).astype(jnp.float32)
    adj = jnp.triu(a_upper, k=1)
    adj = adj + adj.T

    # TAGConv linear params (xavier-uniform-like init, deterministic)
    fan_in, fan_out = 2 * IN_DIM, HIDDEN
    limit = (6.0 / (fan_in + fan_out)) ** 0.5
    w = jax.random.uniform(k_w, (fan_in, fan_out), minval=-limit, maxval=limit,
                           dtype=jnp.float32)
    b = jax.random.uniform(k_b, (fan_out,), minval=-0.1, maxval=0.1,
                           dtype=jnp.float32)

    out = jax.block_until_ready(encoder_forward(adj, x, w, b))
    ref = _reference(adj, x, w, b)

    assert out.shape == (N, HIDDEN)
    assert jnp.allclose(out, ref, atol=1e-5, rtol=1e-5), \
        float(jnp.max(jnp.abs(out - ref)))
    print("KERNEL_OK")
</pallas_src>

<mosaic_0001>
module attributes {stable_mosaic.version = 11 : i64} {
  func.func @encoder_kernel(%arg0: i32, %arg1: i32, %arg2: memref<8x128xf32, #tpu.memory_space<vmem>>, %arg3: memref<128x16xf32, #tpu.memory_space<vmem>>, %arg4: memref<8x16xf32, #tpu.memory_space<vmem>>, %arg5: memref<8x1xf32, #tpu.memory_space<vmem>>, %arg6: memref<32x128xf32, #tpu.memory_space<vmem>>, %arg7: memref<1x128xf32, #tpu.memory_space<vmem>>, %arg8: memref<8x128xf32, #tpu.memory_space<vmem>>, %arg9: memref<8x16xf32, #tpu.memory_space<vmem>>) attributes {dimension_semantics = [#tpu.dimension_semantics<parallel>, #tpu.dimension_semantics<arbitrary>], iteration_bounds = array<i64: 16, 1>, scalar_prefetch = 0 : i64, scratch_operands = 1 : i64, tpu.core_type = #tpu.core_type<tc>, window_params = [{transform_indices = @transform_0, window_bounds = array<i64: 8, 128>}, {transform_indices = @transform_1, window_bounds = array<i64: 128, 16>}, {transform_indices = @transform_2, window_bounds = array<i64: 8, 16>}, {transform_indices = @transform_3, window_bounds = array<i64: 8, 1>}, {pipeline_mode = #tpu.pipeline_mode<synchronous>, transform_indices = @transform_4, window_bounds = array<i64: 32, 128>}, {pipeline_mode = #tpu.pipeline_mode<synchronous>, transform_indices = @transform_5, window_bounds = array<i64: 1, 128>}, {transform_indices = @transform_6, window_bounds = array<i64: 8, 128>}]} {
    %c0_i32 = arith.constant 0 : i32
    %0 = arith.cmpi eq, %arg1, %c0_i32 : i32
    %1 = arith.extui %0 : i1 to i32
    %c0_i32_0 = arith.constant 0 : i32
    %2 = arith.cmpi ne, %1, %c0_i32_0 : i32
    scf.if %2 {
      %cst_10 = arith.constant 0.000000e+00 : f32
      %12 = vector.broadcast %cst_10 : f32 to vector<8x16xf32>
      %c0_11 = arith.constant 0 : index
      %c0_12 = arith.constant 0 : index
      %13 = vector.load %arg9[%c0_11, %c0_12] : memref<8x16xf32, #tpu.memory_space<vmem>>, vector<8x16xf32>
      tpu.vector_store %arg9[%c0_11, %c0_12], %12 {strides = array<i32>} : memref<8x16xf32, #tpu.memory_space<vmem>>, vector<8x16xf32>,
    } else {
    }
    %c0 = arith.constant 0 : index
    %c0_1 = arith.constant 0 : index
    %3 = vector.load %arg9[%c0, %c0_1] : memref<8x16xf32, #tpu.memory_space<vmem>>, vector<8x16xf32>
    %c0_2 = arith.constant 0 : index
    %c0_3 = arith.constant 0 : index
    %4 = vector.load %arg2[%c0_2, %c0_3] : memref<8x128xf32, #tpu.memory_space<vmem>>, vector<8x128xf32>
    %c0_4 = arith.constant 0 : index
    %c0_5 = arith.constant 0 : index
    %5 = vector.load %arg3[%c0_4, %c0_5] : memref<128x16xf32, #tpu.memory_space<vmem>>, vector<128x16xf32>
    %cst = arith.constant dense<0.000000e+00> : vector<8x16xf32>
    %6 = tpu.matmul %4, %5, %cst {dimension_numbers = #tpu.dot_dimension_numbers<[1], [0], [0], [1], [0, 0, 1, 1], [], []>} : vector<8x128xf32>, vector<128x16xf32>, vector<8x16xf32> -> vector<8x16xf32>
    %7 = arith.addf %3, %6 : vector<8x16xf32>
    %c0_6 = arith.constant 0 : index
    %c0_7 = arith.constant 0 : index
    %8 = vector.load %arg9[%c0_6, %c0_7] : memref<8x16xf32, #tpu.memory_space<vmem>>, vector<8x16xf32>
    tpu.vector_store %arg9[%c0_6, %c0_7], %7 {strides = array<i32>} : memref<8x16xf32, #tpu.memory_space<vmem>>, vector<8x16xf32>,
    %c0_i32_8 = arith.constant 0 : i32
    %9 = arith.cmpi eq, %arg1, %c0_i32_8 : i32
    %10 = arith.extui %9 : i1 to i32
    %c0_i32_9 = arith.constant 0 : i32
    %11 = arith.cmpi ne, %10, %c0_i32_9 : i32
    scf.if %11 {
      %c0_10 = arith.constant 0 : index
      %c0_11 = arith.constant 0 : index
      %12 = vector.load %arg9[%c0_10, %c0_11] : memref<8x16xf32, #tpu.memory_space<vmem>>, vector<8x16xf32>
      %c0_12 = arith.constant 0 : index
      %c0_13 = arith.constant 0 : index
      %13 = vector.load %arg5[%c0_12, %c0_13] : memref<8x1xf32, #tpu.memory_space<vmem>>, vector<8x1xf32>
      %14 = vector.broadcast %13 : vector<8x1xf32> to vector<8x16xf32>
      %15 = arith.mulf %12, %14 : vector<8x16xf32>
      %c0_14 = arith.constant 0 : index
      %c0_15 = arith.constant 0 : index
      %16 = vector.load %arg6[%c0_14, %c0_15] : memref<32x128xf32, #tpu.memory_space<vmem>>, vector<16x128xf32>
      %c16 = arith.constant 16 : index
      %c0_16 = arith.constant 0 : index
      %17 = vector.load %arg6[%c16, %c0_16] : memref<32x128xf32, #tpu.memory_space<vmem>>, vector<16x128xf32>
      %c0_17 = arith.constant 0 : index
      %c0_18 = arith.constant 0 : index
      %18 = vector.load %arg4[%c0_17, %c0_18] : memref<8x16xf32, #tpu.memory_space<vmem>>, vector<8x16xf32>
      %cst_19 = arith.constant dense<0.000000e+00> : vector<8x128xf32>
      %19 = tpu.matmul %18, %16, %cst_19 {dimension_numbers = #tpu.dot_dimension_numbers<[1], [0], [0], [1], [0, 0, 1, 1], [], []>} : vector<8x16xf32>, vector<16x128xf32>, vector<8x128xf32> -> vector<8x128xf32>
      %cst_20 = arith.constant dense<0.000000e+00> : vector<8x128xf32>
      %20 = tpu.matmul %15, %17, %cst_20 {dimension_numbers = #tpu.dot_dimension_numbers<[1], [0], [0], [1], [0, 0, 1, 1], [], []>} : vector<8x16xf32>, vector<16x128xf32>, vector<8x128xf32> -> vector<8x128xf32>
      %21 = arith.addf %19, %20 : vector<8x128xf32>
      %c0_21 = arith.constant 0 : index
      %c0_22 = arith.constant 0 : index
      %22 = vector.load %arg7[%c0_21, %c0_22] : memref<1x128xf32, #tpu.memory_space<vmem>>, vector<1x128xf32>
      %23 = vector.broadcast %22 : vector<1x128xf32> to vector<8x128xf32>
      %24 = arith.addf %21, %23 : vector<8x128xf32>
      %25 = arith.mulf %24, %24 : vector<8x128xf32>
      %cst_23 = arith.constant dense<0.000000e+00> : vector<8xf32>
      %26 = vector.multi_reduction <add>, %25, %cst_23 [1] : vector<8x128xf32> to vector<8xf32>
      %27 = vector.shape_cast %26 : vector<8xf32> to vector<8x1xf32>
      %28 = math.rsqrt %27 : vector<8x1xf32>
      %29 = vector.broadcast %28 : vector<8x1xf32> to vector<8x128xf32>
      %30 = arith.mulf %24, %29 : vector<8x128xf32>
      %c0_24 = arith.constant 0 : index
      %c0_25 = arith.constant 0 : index
      %31 = vector.load %arg8[%c0_24, %c0_25] : memref<8x128xf32, #tpu.memory_space<vmem>>, vector<8x128xf32>
      tpu.vector_store %arg8[%c0_24, %c0_25], %30 {strides = array<i32>} : memref<8x128xf32, #tpu.memory_space<vmem>>, vector<8x128xf32>,
    } else {
    }
    return
  }
  func.func @transform_0(%arg0: i32, %arg1: i32) -> (i32, i32) {
    %c0_i32 = arith.constant 0 : i32
    return %arg0, %arg1 : i32, i32
  }
  func.func @transform_1(%arg0: i32, %arg1: i32) -> (i32, i32) {
    %c0_i32 = arith.constant 0 : i32
    %c0_i32_0 = arith.constant 0 : i32
    return %arg1, %c0_i32 : i32, i32
  }
  func.func @transform_2(%arg0: i32, %arg1: i32) -> (i32, i32) {
    %c0_i32 = arith.constant 0 : i32
    %c0_i32_0 = arith.constant 0 : i32
    return %arg0, %c0_i32 : i32, i32
  }
  func.func @transform_3(%arg0: i32, %arg1: i32) -> (i32, i32) {
    %c0_i32 = arith.constant 0 : i32
    %c0_i32_0 = arith.constant 0 : i32
    return %arg0, %c0_i32 : i32, i32
  }
  func.func @transform_4(%arg0: i32, %arg1: i32) -> (i32, i32) {
    %c0_i32 = arith.constant 0 : i32
    %c0_i32_0 = arith.constant 0 : i32
    %c0_i32_1 = arith.constant 0 : i32
    return %c0_i32, %c0_i32_0 : i32, i32
  }
  func.func @transform_5(%arg0: i32, %arg1: i32) -> (i32, i32) {
    %c0_i32 = arith.constant 0 : i32
    %c0_i32_0 = arith.constant 0 : i32
    %c0_i32_1 = arith.constant 0 : i32
    return %c0_i32, %c0_i32_0 : i32, i32
  }
  func.func @transform_6(%arg0: i32, %arg1: i32) -> (i32, i32) {
    %c0_i32 = arith.constant 0 : i32
    %c0_i32_0 = arith.constant 0 : i32
    return %arg0, %c0_i32 : i32, i32
  }
}

</mosaic_0001>

<llo_original>
// kernel: tpu_custom_call.1
$region0: #{tpu_custom_call.1}
  #allocation0 [shape = 'u32[]', space=smem, size = 0x4, offset = 0x4, fixed_abs, tag = 'smem constant byte address 0x4 - core index']
  #allocation1 [shape = 'u32[144,128]{1,0:T(1,128)}', space=vmem, size = 0x12000, scoped, tag = 'internal scratch']
  #allocation2 [shape = 'f32[8,16]{1,0:T(8,128)}', space=vmem, size = 0x1000, scoped, tag = 'scratch operand']
  %s0 = inlined_call_operand.vmem [shape: f32[128,128], index: 0, kind: input, shape index: {}]
  %s1 = inlined_call_operand.vmem [shape: f32[128,16], index: 1, kind: input, shape index: {}]
  %s2 = inlined_call_operand.vmem [shape: f32[128,16], index: 2, kind: input, shape index: {}]
  %s3 = inlined_call_operand.vmem [shape: f32[128,1], index: 3, kind: input, shape index: {}]
  %s4 = inlined_call_operand.vmem [shape: f32[32,128], index: 4, kind: input, shape index: {}]
  %s5 = inlined_call_operand.vmem [shape: f32[1,128], index: 5, kind: input, shape index: {}]
  %s6 = inlined_call_operand.hbm [shape: f32[128,128], index: 6, kind: output, shape index: {}]
  %s7 = sld [smem:[#allocation0]]
  $region65: #{tpu_custom_call.1} parent=0
    _
  %s9 = ssub.s32 1, %s7
  %s10 = scalar_select 0, %s9, %s7
  $region1: #{tpu_custom_call.1} parent=0
    #allocation3 [shape = 'u8[8192]{0}', space=vmem, size = 0x2000, scoped, tag = 'output window, operand 0']
    #allocation4 [shape = 's32[2]{0}', space=sflag, size = 0x8, scoped, tag = 'scoped memory for tpu_custom_call.1']
    %11 = vsyncpa [#allocation4], 0
    %s12 = scalar_lea.sflag [#allocation4], 1
    %13 = vsyncpa %s12, 0
    loop: start=0, step=1, limit=18
    $region2: #{tpu_custom_call.1} parent=1 // loop_pre_header
      _
    $region3: #{tpu_custom_call.1} parent=1 // loop_header
      %s15 = sphi 0, %s19
      %p16 = scmp.ge.s32.totalorder %s15, 18
      %s22 = sphi 0, %s34
      %s23 = sphi 0, %s30
      %s24 = sphi 0, %s22
      %s25 = sphi 0, %s23
      %s26 = sphi 0, %s24
      %s27 = sphi 0, %s25
      %s39 = sphi 0, %s41
      %s42 = sphi 0, %s39
      %s43 = sphi 0, %s42
      %s59 = sphi 0, %s43
      %s65 = sphi 0, %s67
      %s68 = sphi 0, %s65
      %s69 = sphi 0, %s68
      %s85 = sphi 0, %s69
      %s91 = sphi 0, %s93
      %s94 = sphi 0, %s91
      %s95 = sphi 0, %s94
      %s111 = sphi 0, %s95
      %s117 = sphi 0, %s119
      %s120 = sphi 0, %s117
      %s121 = sphi 0, %s120
      %s137 = sphi 0, %s121
      %s141 = sphi 0, %s141
      %s143 = sphi 0, %s141
      %s144 = sphi 0, %s143
      %s158 = sphi 0, %s144
      %s162 = sphi 0, %s162
      %s164 = sphi 0, %s162
      %s165 = sphi 0, %s164
      %s179 = sphi 0, %s165
      %s185 = sphi 0, %s187
      %s188 = sphi 0, %s185
      %s189 = sphi 0, %s188
      %s205 = sphi 0, %s189
    $region4: #{tpu_custom_call.1} parent=1 // loop_header_branch
      %18 = sbr.rel (%p16) target = $region8
    $region5: #{tpu_custom_call.1} parent=1 // loop_body
      %s20 = ssub.s32 %s15, 1
      %s21 = ssub.s32 %s15, 2
      %s28 = sadd.s32 1, %s23
      %p29 = scmp.ge.s32.totalorder %s28, 1
      %s30 = scalar_select %p29, 0, %s28
      %s31 = sadd.s32 1, %s22
      %s32 = scalar_select %p29, %s31, %s22
      %p33 = scmp.ge.s32.totalorder %s32, 16
      %s34 = scalar_select %p33, 0, %s32
      %s35 = ssub.s32 %s22, %s34
      %s36 = ssub.s32 %s23, %s30
      %s37 = sor.u32 %s35, %s36
      %p38 = scmp.eq.s32.totalorder %s37, 0
      %s40 = sadd.s32 %s39, 1
      %s41 = scalar_select %p38, %s39, %s40
      %p44 = pneg %p38
      %p45 = scmp.eq.s32.totalorder %s15, 15
      %p46 = por %p44, %p45
      %p47 = scmp.ne.s32.totalorder %s39, %s42
      %p48 = scmp.eq.s32.totalorder %s15, 0
      %p49 = por %p47, %p48
      %p50 = scmp.ne.s32.totalorder %s39, %s42
      %p51 = scmp.eq.s32.totalorder %s20, 15
      %p52 = por %p50, %p51
      %p53 = scmp.ne.s32.totalorder %s42, %s43
      %p54 = scmp.eq.s32.totalorder %s20, 0
      %p55 = por %p53, %p54
      %p56 = scmp.ne.s32.totalorder %s42, %s43
      %p57 = scmp.eq.s32.totalorder %s21, 15
      %p58 = por %p56, %p57
      %p60 = scmp.ne.s32.totalorder %s43, %s59
      %p61 = scmp.eq.s32.totalorder %s21, 0
      %p62 = por %p60, %p61
      %s63 = ssub.s32 %s23, %s30
      %p64 = scmp.eq.s32.totalorder %s63, 0
      %s66 = sadd.s32 %s65, 1
      %s67 = scalar_select %p64, %s65, %s66
      %p70 = pneg %p64
      %p71 = scmp.eq.s32.totalorder %s15, 15
      %p72 = por %p70, %p71
      %p73 = scmp.ne.s32.totalorder %s65, %s68
      %p74 = scmp.eq.s32.totalorder %s15, 0
      %p75 = por %p73, %p74
      %p76 = scmp.ne.s32.totalorder %s65, %s68
      %p77 = scmp.eq.s32.totalorder %s20, 15
      %p78 = por %p76, %p77
      %p79 = scmp.ne.s32.totalorder %s68, %s69
      %p80 = scmp.eq.s32.totalorder %s20, 0
      %p81 = por %p79, %p80
      %p82 = scmp.ne.s32.totalorder %s68, %s69
      %p83 = scmp.eq.s32.totalorder %s21, 15
      %p84 = por %p82, %p83
      %p86 = scmp.ne.s32.totalorder %s69, %s85
      %p87 = scmp.eq.s32.totalorder %s21, 0
      %p88 = por %p86, %p87
      %s89 = ssub.s32 %s22, %s34
      %p90 = scmp.eq.s32.totalorder %s89, 0
      %s92 = sadd.s32 %s91, 1
      %s93 = scalar_select %p90, %s91, %s92
      %p96 = pneg %p90
      %p97 = scmp.eq.s32.totalorder %s15, 15
      %p98 = por %p96, %p97
      %p99 = scmp.ne.s32.totalorder %s91, %s94
      %p100 = scmp.eq.s32.totalorder %s15, 0
      %p101 = por %p99, %p100
      %p102 = scmp.ne.s32.totalorder %s91, %s94
      %p103 = scmp.eq.s32.totalorder %s20, 15
      %p104 = por %p102, %p103
      %p105 = scmp.ne.s32.totalorder %s94, %s95
      %p106 = scmp.eq.s32.totalorder %s20, 0
      %p107 = por %p105, %p106
      %p108 = scmp.ne.s32.totalorder %s94, %s95
      %p109 = scmp.eq.s32.totalorder %s21, 15
      %p110 = por %p108, %p109
      %p112 = scmp.ne.s32.totalorder %s95, %s111
      %p113 = scmp.eq.s32.totalorder %s21, 0
      %p114 = por %p112, %p113
      %s115 = ssub.s32 %s22, %s34
      %p116 = scmp.eq.s32.totalorder %s115, 0
      %s118 = sadd.s32 %s117, 1
      %s119 = scalar_select %p116, %s117, %s118
      %p122 = pneg %p116
      %p123 = scmp.eq.s32.totalorder %s15, 15
      %p124 = por %p122, %p123
      %p125 = scmp.ne.s32.totalorder %s117, %s120
      %p126 = scmp.eq.s32.totalorder %s15, 0
      %p127 = por %p125, %p126
      %p128 = scmp.ne.s32.totalorder %s117, %s120
      %p129 = scmp.eq.s32.totalorder %s20, 15
      %p130 = por %p128, %p129
      %p131 = scmp.ne.s32.totalorder %s120, %s121
      %p132 = scmp.eq.s32.totalorder %s20, 0
      %p133 = por %p131, %p132
      %p134 = scmp.ne.s32.totalorder %s120, %s121
      %p135 = scmp.eq.s32.totalorder %s21, 15
      %p136 = por %p134, %p135
      %p138 = scmp.ne.s32.totalorder %s121, %s137
      %p139 = scmp.eq.s32.totalorder %s21, 0
      %p140 = por %p138, %p139
      %s142 = sadd.s32 %s141, 1
      %p145 = scmp.eq.s32.totalorder %s15, 15
      %p146 = scmp.ne.s32.totalorder %s141, %s143
      %p147 = scmp.eq.s32.totalorder %s15, 0
      %p148 = por %p146, %p147
      %p149 = scmp.ne.s32.totalorder %s141, %s143
      %p150 = scmp.eq.s32.totalorder %s20, 15
      %p151 = por %p149, %p150
      %p152 = scmp.ne.s32.totalorder %s143, %s144
      %p153 = scmp.eq.s32.totalorder %s20, 0
      %p154 = por %p152, %p153
      %p155 = scmp.ne.s32.totalorder %s143, %s144
      %p156 = scmp.eq.s32.totalorder %s21, 15
      %p157 = por %p155, %p156
      %p159 = scmp.ne.s32.totalorder %s144, %s158
      %p160 = scmp.eq.s32.totalorder %s21, 0
      %p161 = por %p159, %p160
      %s163 = sadd.s32 %s162, 1
      %p166 = scmp.eq.s32.totalorder %s15, 15
      %p167 = scmp.ne.s32.totalorder %s162, %s164
      %p168 = scmp.eq.s32.totalorder %s15, 0
      %p169 = por %p167, %p168
      %p170 = scmp.ne.s32.totalorder %s162, %s164
      %p171 = scmp.eq.s32.totalorder %s20, 15
      %p172 = por %p170, %p171
      %p173 = scmp.ne.s32.totalorder %s164, %s165
      %p174 = scmp.eq.s32.totalorder %s20, 0
      %p175 = por %p173, %p174
      %p176 = scmp.ne.s32.totalorder %s164, %s165
      %p177 = scmp.eq.s32.totalorder %s21, 15
      %p178 = por %p176, %p177
      %p180 = scmp.ne.s32.totalorder %s165, %s179
      %p181 = scmp.eq.s32.totalorder %s21, 0
      %p182 = por %p180, %p181
      %s183 = ssub.s32 %s22, %s34
      %p184 = scmp.eq.s32.totalorder %s183, 0
      %s186 = sadd.s32 %s185, 1
      %s187 = scalar_select %p184, %s185, %s186
      %p190 = pneg %p184
      %p191 = scmp.eq.s32.totalorder %s15, 15
      %p192 = por %p190, %p191
      %p193 = scmp.ne.s32.totalorder %s185, %s188
      %p194 = scmp.eq.s32.totalorder %s15, 0
      %p195 = por %p193, %p194
      %p196 = scmp.ne.s32.totalorder %s185, %s188
      %p197 = scmp.eq.s32.totalorder %s20, 15
      %p198 = por %p196, %p197
      %p199 = scmp.ne.s32.totalorder %s188, %s189
      %p200 = scmp.eq.s32.totalorder %s20, 0
      %p201 = por %p199, %p200
      %p202 = scmp.ne.s32.totalorder %s188, %s189
      %p203 = scmp.eq.s32.totalorder %s21, 15
      %p204 = por %p202, %p203
      %p206 = scmp.ne.s32.totalorder %s189, %s205
      %p207 = scmp.eq.s32.totalorder %s21, 0
      %p208 = por %p206, %p207
      %p209 = scmp.le.s32.totalorder 1, %s15
      %p210 = scmp.lt.s32.totalorder %s15, 17
      %p211 = pnand %p209, %p210
      %p212 = pneg %p211
      // Predicated region
      $region9: #{tpu_custom_call.1} parent=5 // pred_check
        _
      $region10: #{tpu_custom_call.1} parent=5 // pred_check_branch
        %214 = sbr.rel (%p211) target = $region12
      $region11: #{tpu_custom_call.1} parent=5 // pred_region
        %s215 = ssub.s32 %s15, 1
        // Predicated region
        $region13: #{tpu_custom_call.1} parent=11 // pred_check
          %p216 = pneg %p81
        $region14: #{tpu_custom_call.1} parent=11 // pred_check_branch
          %218 = sbr.rel (%p216) target = $region16
        $region15: #{tpu_custom_call.1} parent=11 // pred_region
          %s219 = smul.u32 16, %s25
          %p220 = scmp.lt.s32.totalorder %s219, 15
          %s221 = scalar_select %p220, %s219, 15
          %s222 = smul.addr %s221, 8
          %s223 = scalar_lea.vmem %s1, %s222
          %s224 = smul.u32 16, %s25
        $region16: #{tpu_custom_call.1} parent=11 // pred_fallthru
          _
        // Predicated region
        $region17: #{tpu_custom_call.1} parent=11 // pred_check
          %p225 = pneg %p154
        $region18: #{tpu_custom_call.1} parent=11 // pred_check_branch
          %227 = sbr.rel (%p225) target = $region20
        $region19: #{tpu_custom_call.1} parent=11 // pred_region
          _
        $region20: #{tpu_custom_call.1} parent=11 // pred_fallthru
          _
        // Predicated region
        $region21: #{tpu_custom_call.1} parent=11 // pred_check
          %p228 = pneg %p175
        $region22: #{tpu_custom_call.1} parent=11 // pred_check_branch
          %230 = sbr.rel (%p228) target = $region24
        $region23: #{tpu_custom_call.1} parent=11 // pred_region
          _
        $region24: #{tpu_custom_call.1} parent=11 // pred_fallthru
          _
      $region12: #{tpu_custom_call.1} parent=5 // pred_fallthru
        _
      %p231 = scmp.lt.s32.totalorder %s15, 16
      // Predicated region
      $region25: #{tpu_custom_call.1} parent=5 // pred_check
        %p232 = pneg %p231
      $region26: #{tpu_custom_call.1} parent=5 // pred_check_branch
        %234 = sbr.rel (%p232) target = $region28
      $region27: #{tpu_custom_call.1} parent=5 // pred_region
        // Predicated region
        $region29: #{tpu_custom_call.1} parent=27 // pred_check
          %p235 = pneg %p49
        $region30: #{tpu_custom_call.1} parent=27 // pred_check_branch
          %237 = sbr.rel (%p235) target = $region32
        $region31: #{tpu_custom_call.1} parent=27 // pred_region
          %p238 = scmp.lt.s32.totalorder %s22, 15
          %s239 = scalar_select %p238, %s22, 15
          %p240 = scmp.lt.s32.totalorder %s23, 0
          %s241 = scalar_select %p240, %s23, 0
          %s242 = sadd.s32 %s241, %s239
          %s243 = smul.addr %s242, 8
          %s244 = scalar_lea.vmem %s0, %s243
        $region32: #{tpu_custom_call.1} parent=27 // pred_fallthru
          _
        // Predicated region
        $region33: #{tpu_custom_call.1} parent=27 // pred_check
          %p245 = pneg %p101
        $region34: #{tpu_custom_call.1} parent=27 // pred_check_branch
          %247 = sbr.rel (%p245) target = $region36
        $region35: #{tpu_custom_call.1} parent=27 // pred_region
          %p248 = scmp.lt.s32.totalorder %s22, 15
          %s249 = scalar_select %p248, %s22, 15
          %s250 = smul.addr %s249, 8
          %s251 = scalar_lea.vmem %s2, %s250
        $region36: #{tpu_custom_call.1} parent=27 // pred_fallthru
          _
        // Predicated region
        $region37: #{tpu_custom_call.1} parent=27 // pred_check
          %p252 = pneg %p127
        $region38: #{tpu_custom_call.1} parent=27 // pred_check_branch
          %254 = sbr.rel (%p252) target = $region40
        $region39: #{tpu_custom_call.1} parent=27 // pred_region
          %p255 = scmp.lt.s32.totalorder %s22, 15
          %s256 = scalar_select %p255, %s22, 15
          %s257 = smul.addr %s256, 8
          %s258 = scalar_lea.vmem %s3, %s257
        $region40: #{tpu_custom_call.1} parent=27 // pred_fallthru
          _
      $region28: #{tpu_custom_call.1} parent=5 // pred_fallthru
        _
      %p259 = scmp.le.s32.totalorder 1, %s15
      %p260 = scmp.lt.s32.totalorder %s15, 17
      %p261 = pnand %p259, %p260
      %p262 = pneg %p261
      // Predicated region
      $region41: #{tpu_custom_call.1} parent=5 // pred_check
        _
      $region42: #{tpu_custom_call.1} parent=5 // pred_check_branch
        %264 = sbr.rel (%p261) target = $region44
      $region43: #{tpu_custom_call.1} parent=5 // pred_region
        %s265 = ssub.s32 %s15, 1
        %p266 = scmp.lt.s32.totalorder %s24, 15
        %s267 = scalar_select %p266, %s24, 15
        %p268 = scmp.lt.s32.totalorder %s25, 0
        %s269 = scalar_select %p268, %s25, 0
        %s270 = sadd.s32 %s269, %s267
        %s271 = smul.addr %s270, 8
        %s272 = scalar_lea.vmem %s0, %s271
        %p273 = pneg %p55
        %p274 = pneg %p52
        %s275 = smul.u32 16, %s25
        %p276 = scmp.lt.s32.totalorder %s275, 15
        %s277 = scalar_select %p276, %s275, 15
        %s278 = smul.addr %s277, 8
        %s279 = scalar_lea.vmem %s1, %s278
        %p280 = pneg %p81
        %p281 = pneg %p78
        %p282 = scmp.lt.s32.totalorder %s24, 15
        %s283 = scalar_select %p282, %s24, 15
        %s284 = smul.addr %s283, 8
        %s285 = scalar_lea.vmem %s2, %s284
        %p286 = pneg %p107
        %p287 = pneg %p104
        %p288 = scmp.lt.s32.totalorder %s24, 15
        %s289 = scalar_select %p288, %s24, 15
        %s290 = smul.addr %s289, 8
        %s291 = scalar_lea.vmem %s3, %s290
        %p292 = pneg %p133
        %p293 = pneg %p130
        %p294 = pneg %p154
        %p295 = pneg %p151
        %p296 = pneg %p175
        %p297 = pneg %p172
        %p298 = pneg %p201
        %p299 = pneg %p198
        %s300 = sand.u32 %s188, 1
        %s301 = scalar_lea.sflag [#allocation4], %s300
        %s302 = sand.u32 %s188, 1
        %s303 = smul.addr %s302, 8
        %s304 = scalar_lea.vmem [#allocation3], %s303
        %p305 = scmp.lt.s32.totalorder %s24, 15
        %s306 = scalar_select %p305, %s24, 15
        %p307 = scmp.lt.s32.totalorder %s25, 0
        %s308 = scalar_select %p307, %s25, 0
        %s309 = sadd.s32 %s308, %s306
        %s310 = smul.addr %s309, 8
        %s311 = scalar_lea.vmem %s0, %s310
        %s312 = smul.u32 16, %s25
        %p313 = scmp.lt.s32.totalorder %s312, 15
        %s314 = scalar_select %p313, %s312, 15
        %s315 = smul.addr %s314, 8
        %s316 = scalar_lea.vmem %s1, %s315
        %s317 = smul.u32 16, %s25
        %p318 = scmp.lt.s32.totalorder %s24, 15
        %s319 = scalar_select %p318, %s24, 15
        %s320 = smul.addr %s319, 8
        %s321 = scalar_lea.vmem %s2, %s320
        %p322 = scmp.lt.s32.totalorder %s24, 15
        %s323 = scalar_select %p322, %s24, 15
        %s324 = smul.addr %s323, 8
        %s325 = scalar_lea.vmem %s3, %s324
        %p326 = scmp.eq.s32.totalorder %s25, 0
        // Predicated region
        $region45: #{tpu_custom_call.1} parent=43 // pred_check
          %p327 = pneg %p326
        $region46: #{tpu_custom_call.1} parent=43 // pred_check_branch
          %329 = sbr.rel (%p327) target = $region48
        $region47: #{tpu_custom_call.1} parent=43 // pred_region
          %vm330 = vcmask 130048
          %331 = vst.msk [vmem:[#allocation2] sm:$0xff] %vm330, 0.0
        $region48: #{tpu_custom_call.1} parent=43 // pred_fallthru
          _
        %v332 = vld [vmem:[#allocation2] sm:$0xff]
        %v333 = vld [vmem:[%s311] sm:$0xff]
        %v334 = vld [vmem:[%s316] sm:$0xff]
        %v335 = vld [vmem:[%s316 + $0x8] sm:$0xff]
        %v336 = vld [vmem:[%s316 + $0x10] sm:$0xff]
        %v337 = vld [vmem:[%s316 + $0x18] sm:$0xff]
        %v338 = vld [vmem:[%s316 + $0x20] sm:$0xff]
        %v339 = vld [vmem:[%s316 + $0x28] sm:$0xff]
        %v340 = vld [vmem:[%s316 + $0x30] sm:$0xff]
        %v341 = vld [vmem:[%s316 + $0x38] sm:$0xff]
        %v342 = vld [vmem:[%s316 + $0x40] sm:$0xff]
        %v343 = vld [vmem:[%s316 + $0x48] sm:$0xff]
        %v344 = vld [vmem:[%s316 + $0x50] sm:$0xff]
        %v345 = vld [vmem:[%s316 + $0x58] sm:$0xff]
        %v346 = vld [vmem:[%s316 + $0x60] sm:$0xff]
        %v347 = vld [vmem:[%s316 + $0x68] sm:$0xff]
        %v348 = vld [vmem:[%s316 + $0x70] sm:$0xff]
        %v349 = vld [vmem:[%s316 + $0x78] sm:$0xff]
        %350 = vmatprep.subr.mxu0 0.0
        %351 = vmatpush1.msra.mxu0 %v349
        %352 = vmatprep.subr.mxu0 0.0
        %353 = vmatpush1.msra.mxu0 %v348
        %354 = vmatprep.subr.mxu0 0.0
        %355 = vmatpush1.msra.mxu0 %v347
        %356 = vmatprep.subr.mxu0 0.0
        %357 = vmatpush1.msra.mxu0 %v346
        %358 = vmatprep.subr.mxu0 0.0
        %359 = vmatpush1.msra.mxu0 %v345
        %360 = vmatprep.subr.mxu0 0.0
        %361 = vmatpush1.msra.mxu0 %v344
        %362 = vmatprep.subr.mxu0 0.0
        %363 = vmatpush1.msra.mxu0 %v343
        %364 = vmatprep.subr.mxu0 0.0
        %365 = vmatpush1.msra.mxu0 %v342
        %366 = vmatprep.subr.mxu0 0.0
        %367 = vmatpush1.msra.mxu0 %v341
        %368 = vmatprep.subr.mxu0 0.0
        %369 = vmatpush1.msra.mxu0 %v340
        %370 = vmatprep.subr.mxu0 0.0
        %371 = vmatpush1.msra.mxu0 %v339
        %372 = vmatprep.subr.mxu0 0.0
        %373 = vmatpush1.msra.mxu0 %v338
        %374 = vmatprep.subr.mxu0 0.0
        %375 = vmatpush1.msra.mxu0 %v337
        %376 = vmatprep.subr.mxu0 0.0
        %377 = vmatpush1.msra.mxu0 %v336
        %378 = vmatprep.subr.mxu0 0.0
        %379 = vmatpush1.msra.mxu0 %v335
        %380 = vmatprep.subr.mxu0 0.0
        %381 = vmatpush1.msra.mxu0 %v334
        %382 = vmatprep.subr.mxu0 0.0
        %383 = vmatpush2.msra.mxu0 0.0
        %384 = vmatprep.subr.mxu0 0.0
        %385 = vmatpush2.msra.mxu0 0.0
        %386 = vmatprep.subr.mxu0 0.0
        %387 = vmatpush2.msra.mxu0 0.0
        %388 = vmatprep.subr.mxu0 0.0
        %389 = vmatpush2.msra.mxu0 0.0
        %390 = vmatprep.subr.mxu0 0.0
        %391 = vmatpush2.msra.mxu0 0.0
        %392 = vmatprep.subr.mxu0 0.0
        %393 = vmatpush2.msra.mxu0 0.0
        %394 = vmatprep.subr.mxu0 0.0
        %395 = vmatpush2.msra.mxu0 0.0
        %396 = vmatprep.subr.mxu0 0.0
        %397 = vmatpush2.msra.mxu0 0.0
        %398 = vmatprep.subr.mxu0 0.0
        %399 = vmatpush2.msra.mxu0 0.0
        %400 = vmatprep.subr.mxu0 0.0
        %401 = vmatpush2.msra.mxu0 0.0
        %402 = vmatprep.subr.mxu0 0.0
        %403 = vmatpush2.msra.mxu0 0.0
        %404 = vmatprep.subr.mxu0 0.0
        %405 = vmatpush2.msra.mxu0 0.0
        %406 = vmatprep.subr.mxu0 0.0
        %407 = vmatpush2.msra.mxu0 0.0
        %408 = vmatprep.subr.mxu0 0.0
        %409 = vmatpush2.msra.mxu0 0.0
        %410 = vmatprep.subr.mxu0 0.0
        %411 = vmatpush2.msra.mxu0 0.0
        %412 = vmatprep.subr.mxu0 0.0
        %413 = vmatpush2.msra.mxu0 0.0
        %414 = vmatprep.mubr.f32.mxu0 0.0
        %415 = vmatmul.mubr.f32.gmra.mxu0 %v333
        %v416 = vpop.f32.mrf.mxu0
        %v417 = vadd.f32 0.0, %v416
        %v418 = vpop.f32.mrf.mxu0
        %419 = vdwg.mxu0
        %v420 = vadd.f32 %v332, %v417
        %vm421 = vcmask 130048
        %422 = vst.msk [vmem:[#allocation2] sm:$0xff] %vm421, %v420
        // Predicated region
        $region49: #{tpu_custom_call.1} parent=43 // pred_check
          %p423 = pneg %p326
        $region50: #{tpu_custom_call.1} parent=43 // pred_check_branch
          %425 = sbr.rel (%p423) target = $region52
        $region51: #{tpu_custom_call.1} parent=43 // pred_region
          %v426 = vld [vmem:[#allocation2] sm:$0xff]
          %v427 = vld [vmem:[%s325] sm:$0xff]
          %429 = vset.pattern.permute.xlu0 0
          %430 = vperm.xlu0 %429, %v427
          %v431 = vpop.permute.xlu0 %430
          %v433 = vmul.f32 %v426, %v431
          %v434 = vld [vmem:[%s4] sm:$0xff]
          %v435 = vld [vmem:[%s4 + $0x8] sm:$0xff]
          %v436 = vld [vmem:[%s4 + $0x10] sm:$0xff]
          %v437 = vld [vmem:[%s4 + $0x18] sm:$0xff]
          %v438 = vld [vmem:[%s321] sm:$0xff]
          %v440 = vsel %vm421, %v433, 0
          %442 = vmatprep.subr.mxu0 0.0
          %443 = vmatpush1.msra.mxu0 0.0
          %444 = vmatprep.subr.mxu0 0.0
          %445 = vmatpush1.msra.mxu0 0.0
          %446 = vmatprep.subr.mxu0 0.0
          %447 = vmatpush1.msra.mxu0 0.0
          %448 = vmatprep.subr.mxu0 0.0
          %449 = vmatpush1.msra.mxu0 0.0
          %450 = vmatprep.subr.mxu0 0.0
          %451 = vmatpush1.msra.mxu0 0.0
          %452 = vmatprep.subr.mxu0 0.0
          %453 = vmatpush1.msra.mxu0 0.0
          %454 = vmatprep.subr.mxu0 0.0
          %455 = vmatpush1.msra.mxu0 0.0
          %456 = vmatprep.subr.mxu0 0.0
          %457 = vmatpush1.msra.mxu0 0.0
          %458 = vmatprep.subr.mxu0 0.0
          %459 = vmatpush1.msra.mxu0 0.0
          %460 = vmatprep.subr.mxu0 0.0
          %461 = vmatpush1.msra.mxu0 0.0
          %462 = vmatprep.subr.mxu0 0.0
          %463 = vmatpush1.msra.mxu0 0.0
          %464 = vmatprep.subr.mxu0 0.0
          %465 = vmatpush1.msra.mxu0 0.0
          %466 = vmatprep.subr.mxu0 0.0
          %467 = vmatpush1.msra.mxu0 0.0
          %468 = vmatprep.subr.mxu0 0.0
          %469 = vmatpush1.msra.mxu0 0.0
          %470 = vmatprep.subr.mxu0 0.0
          %471 = vmatpush1.msra.mxu0 %v437
          %472 = vmatprep.subr.mxu0 0.0
          %473 = vmatpush1.msra.mxu0 %v436
          %474 = vmatprep.subr.mxu0 0.0
          %475 = vmatpush2.msra.mxu0 0.0
          %476 = vmatprep.subr.mxu0 0.0
          %477 = vmatpush2.msra.mxu0 0.0
          %478 = vmatprep.subr.mxu0 0.0
          %479 = vmatpush2.msra.mxu0 0.0
          %480 = vmatprep.subr.mxu0 0.0
          %481 = vmatpush2.msra.mxu0 0.0
          %482 = vmatprep.subr.mxu0 0.0
          %483 = vmatpush2.msra.mxu0 0.0
          %484 = vmatprep.subr.mxu0 0.0
          %485 = vmatpush2.msra.mxu0 0.0
          %486 = vmatprep.subr.mxu0 0.0
          %487 = vmatpush2.msra.mxu0 0.0
          %488 = vmatprep.subr.mxu0 0.0
          %489 = vmatpush2.msra.mxu0 0.0
          %490 = vmatprep.subr.mxu0 0.0
          %491 = vmatpush2.msra.mxu0 0.0
          %492 = vmatprep.subr.mxu0 0.0
          %493 = vmatpush2.msra.mxu0 0.0
          %494 = vmatprep.subr.mxu0 0.0
          %495 = vmatpush2.msra.mxu0 0.0
          %496 = vmatprep.subr.mxu0 0.0
          %497 = vmatpush2.msra.mxu0 0.0
          %498 = vmatprep.subr.mxu0 0.0
          %499 = vmatpush2.msra.mxu0 0.0
          %500 = vmatprep.subr.mxu0 0.0
          %501 = vmatpush2.msra.mxu0 0.0
          %502 = vmatprep.subr.mxu0 0.0
          %503 = vmatpush2.msra.mxu0 0.0
          %504 = vmatprep.subr.mxu0 0.0
          %505 = vmatpush2.msra.mxu0 0.0
          %506 = vmatprep.mubr.f32.mxu0 0.0
          %507 = vmatmul.mubr.f32.gmra.mxu0 %v440
          %v508 = vpop.f32.mrf.mxu0
          %v509 = vadd.f32 0.0, %v508
          %v510 = vpop.f32.mrf.mxu0
          %511 = vdwg.mxu0
          %v513 = vsel %vm421, %v438, 0
          %515 = vmatprep.subr.mxu0 0.0
          %516 = vmatpush1.msra.mxu0 0.0
          %517 = vmatprep.subr.mxu0 0.0
          %518 = vmatpush1.msra.mxu0 0.0
          %519 = vmatprep.subr.mxu0 0.0
          %520 = vmatpush1.msra.mxu0 0.0
          %521 = vmatprep.subr.mxu0 0.0
          %522 = vmatpush1.msra.mxu0 0.0
          %523 = vmatprep.subr.mxu0 0.0
          %524 = vmatpush1.msra.mxu0 0.0
          %525 = vmatprep.subr.mxu0 0.0
          %526 = vmatpush1.msra.mxu0 0.0
          %527 = vmatprep.subr.mxu0 0.0
          %528 = vmatpush1.msra.mxu0 0.0
          %529 = vmatprep.subr.mxu0 0.0
          %530 = vmatpush1.msra.mxu0 0.0
          %531 = vmatprep.subr.mxu0 0.0
          %532 = vmatpush1.msra.mxu0 0.0
          %533 = vmatprep.subr.mxu0 0.0
          %534 = vmatpush1.msra.mxu0 0.0
          %535 = vmatprep.subr.mxu0 0.0
          %536 = vmatpush1.msra.mxu0 0.0
          %537 = vmatprep.subr.mxu0 0.0
          %538 = vmatpush1.msra.mxu0 0.0
          %539 = vmatprep.subr.mxu0 0.0
          %540 = vmatpush1.msra.mxu0 0.0
          %541 = vmatprep.subr.mxu0 0.0
          %542 = vmatpush1.msra.mxu0 0.0
          %543 = vmatprep.subr.mxu0 0.0
          %544 = vmatpush1.msra.mxu0 %v435
          %545 = vmatprep.subr.mxu0 0.0
          %546 = vmatpush1.msra.mxu0 %v434
          %547 = vmatprep.subr.mxu0 0.0
          %548 = vmatpush2.msra.mxu0 0.0
          %549 = vmatprep.subr.mxu0 0.0
          %550 = vmatpush2.msra.mxu0 0.0
          %551 = vmatprep.subr.mxu0 0.0
          %552 = vmatpush2.msra.mxu0 0.0
          %553 = vmatprep.subr.mxu0 0.0
          %554 = vmatpush2.msra.mxu0 0.0
          %555 = vmatprep.subr.mxu0 0.0
          %556 = vmatpush2.msra.mxu0 0.0
          %557 = vmatprep.subr.mxu0 0.0
          %558 = vmatpush2.msra.mxu0 0.0
          %559 = vmatprep.subr.mxu0 0.0
          %560 = vmatpush2.msra.mxu0 0.0
          %561 = vmatprep.subr.mxu0 0.0
          %562 = vmatpush2.msra.mxu0 0.0
          %563 = vmatprep.subr.mxu0 0.0
          %564 = vmatpush2.msra.mxu0 0.0
          %565 = vmatprep.subr.mxu0 0.0
          %566 = vmatpush2.msra.mxu0 0.0
          %567 = vmatprep.subr.mxu0 0.0
          %568 = vmatpush2.msra.mxu0 0.0
          %569 = vmatprep.subr.mxu0 0.0
          %570 = vmatpush2.msra.mxu0 0.0
          %571 = vmatprep.subr.mxu0 0.0
          %572 = vmatpush2.msra.mxu0 0.0
          %573 = vmatprep.subr.mxu0 0.0
          %574 = vmatpush2.msra.mxu0 0.0
          %575 = vmatprep.subr.mxu0 0.0
          %576 = vmatpush2.msra.mxu0 0.0
          %577 = vmatprep.subr.mxu0 0.0
          %578 = vmatpush2.msra.mxu0 0.0
          %579 = vmatprep.mubr.f32.mxu0 0.0
          %580 = vmatmul.mubr.f32.gmra.mxu0 %v513
          %v581 = vpop.f32.mrf.mxu0
          %v582 = vadd.f32 %v509, %v581
          %v583 = vpop.f32.mrf.mxu0
          %584 = vdwg.mxu0
          %v585 = vld [vmem:[%s5] sm:$0x1]
          %v587 = vlaneseq
          %v588 = vshrl.u32 %v587, 7
          %v589 = vsub.s32 0, %v588
          %v590 = vrot.slane %v585, %v589
          %v592 = vadd.f32 %v582, %v590
          %v593 = vmul.f32 %v592, %v592
          %594 = vadd.xlane.f32.xlu0 %v593
          %v595 = vpop.xlane.xlu0 %594
          %v596 = vrsqrt.pop %v595
          %v597 = vmul.f32 %v592, %v596
          %598 = vst [vmem:[%s304] sm:$0xff] %v597
        $region52: #{tpu_custom_call.1} parent=43 // pred_fallthru
          _
        %s599 = sand.u32 %s188, 1
        %s600 = scalar_lea.sflag [#allocation4], %s599
        %s601 = sand.u32 %s188, 1
        %s602 = smul.addr %s601, 8
        %s603 = scalar_lea.vmem [#allocation3], %s602
        // Predicated region
        $region53: #{tpu_custom_call.1} parent=43 // pred_check
          %p604 = pneg %p198
        $region54: #{tpu_custom_call.1} parent=43 // pred_check_branch
          %606 = sbr.rel (%p604) target = $region56
        $region55: #{tpu_custom_call.1} parent=43 // pred_region
          %s608 = ssub.s32 128, 128
          %609 = vsyncadd %s600, %s608
          %s610 = smul.addr %s24, 128
          %s611 = scalar_lea.hbm %s6, %s610
          %s613 = sshll.u32 %s603, 4
          %s614 = int_to_ptr.vmem [resolvable:$true] %s613
          %616 = dma.vmem_to_hbm [thread:$0]  %s614, 128, %s611, %s600
        $region56: #{tpu_custom_call.1} parent=43 // pred_fallthru
          _
      $region44: #{tpu_custom_call.1} parent=5 // pred_fallthru
        _
      %p617 = scmp.le.s32.totalorder 2, %s15
      // Predicated region
      $region57: #{tpu_custom_call.1} parent=5 // pred_check
        %p618 = pneg %p617
      $region58: #{tpu_custom_call.1} parent=5 // pred_check_branch
        %620 = sbr.rel (%p618) target = $region60
      $region59: #{tpu_custom_call.1} parent=5 // pred_region
        %s621 = ssub.s32 %s15, 2
        // Predicated region
        $region61: #{tpu_custom_call.1} parent=59 // pred_check
          %p622 = pneg %p204
        $region62: #{tpu_custom_call.1} parent=59 // pred_check_branch
          %624 = sbr.rel (%p622) target = $region64
        $region63: #{tpu_custom_call.1} parent=59 // pred_region
          %s625 = sand.u32 %s189, 1
          %s626 = scalar_lea.sflag [#allocation4], %s625
          %s627 = sand.u32 %s189, 1
          %s628 = smul.addr %s627, 8
          %s629 = scalar_lea.vmem [#allocation3], %s628
          %630 = dma.done %s626, 128
        $region64: #{tpu_custom_call.1} parent=59 // pred_fallthru
          _
      $region60: #{tpu_custom_call.1} parent=5 // pred_fallthru
        _
    $region6: #{tpu_custom_call.1} parent=1 // loop_footer
      %s19 = sadd.s32 1, %s15
    $region7: #{tpu_custom_call.1} parent=1 // loop_footer_branch
      %14 = sbr.rel target = $region3
    $region8: #{tpu_custom_call.1} parent=1 // loop_exit
      _
    %631 = vsyncpa [#allocation4], 1
    %s632 = scalar_lea.sflag [#allocation4], 1
    %633 = vsyncpa %s632, 1

</llo_original>
